<compile_context>
chip_gen: v7x
topology: tpu7x:2x2x1
jax: 0.10.0
libtpu: 0.0.40
codegen_flags: <defaults>
</compile_context>

<pallas_src>
import jax
import jax.numpy as jnp
from jax.experimental import pallas as pl
from jax.experimental.pallas import tpu as pltpu

COLS = 512                              # slab lane width (multiple of 128)
TARGET_BLOCK_BYTES = 4 * 1024 * 1024    # ~4 MiB per pipeline buffer / stream
VMEM_LIMIT_BYTES = 32 * 1024 * 1024     # fits scoped VMEM on v5e/v6e/v7x


def _cdiv(a, b):
    return (a + b - 1) // b


def _round_up(a, b):
    return _cdiv(a, b) * b


# ---------------------------------------------------------------- kernels ---

def _sq_diff_kernel(x_ref, y_ref, o_ref):
    # reduction='none': elementwise squared difference, f32 output.
    # A partial last block writes garbage to its OOB rows, which Pallas
    # discards on writeback, so no masking is needed here.
    d = x_ref[...].astype(jnp.float32) - y_ref[...].astype(jnp.float32)
    o_ref[...] = d * d


def _make_sse_kernel(*, steps, num_blocks, rows, block_rows, has_ghost):
    """Sum-of-squared-errors kernel over grid (shards, steps).

    o_ref is a resident (8, COLS) f32 accumulator per shard (same output
    block across the 'arbitrary' step axis).
    """
    ragged = (rows % block_rows) != 0

    def kernel(x_ref, y_ref, o_ref):
        i = pl.program_id(1)
        b = pl.program_id(0) * steps + i          # global block index

        @pl.when(i == 0)
        def _init():
            o_ref[...] = jnp.zeros_like(o_ref)

        def accumulate():
            d = x_ref[...].astype(jnp.float32) - y_ref[...].astype(jnp.float32)
            dsq = d * d                            # (block_rows, COLS)
            if ragged:
                # Mask garbage rows of the partial last block (cheap VPU work,
                # hidden under DMA; only emitted for ragged row counts).
                row_ids = jax.lax.broadcasted_iota(jnp.int32, dsq.shape, 0)
                valid = (b * block_rows + row_ids) < rows
                dsq = jnp.where(valid, dsq, 0.0)
            br, c = dsq.shape
            # Fold rows onto 8 sublanes with pure elementwise VPU adds
            # (layout-preserving; no cross-lane traffic, no scalar reduce).
            o_ref[...] += dsq.reshape(br // 8, 8, c).sum(axis=0)

        if has_ghost:
            # Ghost step of the 2-shard split: its DMA is clamped to the last
            # real block; skip accumulating it so nothing is double counted.
            pl.when(b < num_blocks)(accumulate)
        else:
            accumulate()

    return kernel


# ------------------------------------------------------------ pallas calls ---

def _sq_diff_2d(x2d, y2d, rows):
    # Block sized by the widest stream (the f32 output): 4 MiB -> 2048 rows.
    max_rows = max(8, (TARGET_BLOCK_BYTES // (COLS * 4)) // 8 * 8)
    # >= 4 blocks when possible so v7x's 2 TensorCores each get >= 2 steps.
    block_rows = min(_round_up(_cdiv(rows, 4), 8), max_rows)
    num_blocks = _cdiv(rows, block_rows)

    return pl.pallas_call(
        _sq_diff_kernel,
        out_shape=jax.ShapeDtypeStruct((rows, COLS), jnp.float32),
        grid_spec=pltpu.PrefetchScalarGridSpec(
            num_scalar_prefetch=0,
            grid=(num_blocks,),
            in_specs=[
                pl.BlockSpec((block_rows, COLS), lambda i: (i, 0)),
                pl.BlockSpec((block_rows, COLS), lambda i: (i, 0)),
            ],
            out_specs=pl.BlockSpec((block_rows, COLS), lambda i: (i, 0)),
        ),
        compiler_params=pltpu.CompilerParams(
            dimension_semantics=("parallel",),
            vmem_limit_bytes=VMEM_LIMIT_BYTES,
        ),
    )(x2d, y2d)


def _mse_partial_sums(x2d, y2d, rows):
    # Dtype-aware block sizing: keep per-step DMA ~4 MiB per input buffer
    # (f32 -> 2048 rows, bf16/f16 -> 4096 rows).
    itemsize = max(x2d.dtype.itemsize, y2d.dtype.itemsize)
    max_rows = max(8, (TARGET_BLOCK_BYTES // (COLS * itemsize)) // 8 * 8)
    block_rows = min(_round_up(_cdiv(rows, 4), 8), max_rows)
    num_blocks = _cdiv(rows, block_rows)

    shards = 2 if num_blocks >= 2 else 1           # megacore split (v7x)
    steps = _cdiv(num_blocks, shards)
    has_ghost = shards * steps > num_blocks        # odd block count

    def in_map(s, i):
        b = s * steps + i
        if has_ghost:
            b = jnp.minimum(b, num_blocks - 1)     # clamp: no pad, no OOB block
        return (b, 0)

    kernel = _make_sse_kernel(steps=steps, num_blocks=num_blocks, rows=rows,
                              block_rows=block_rows, has_ghost=has_ghost)

    return pl.pallas_call(
        kernel,
        out_shape=jax.ShapeDtypeStruct((shards, 8, COLS), jnp.float32),
        grid_spec=pltpu.PrefetchScalarGridSpec(
            num_scalar_prefetch=0,
            grid=(shards, steps),
            in_specs=[
                pl.BlockSpec((block_rows, COLS), in_map),
                pl.BlockSpec((block_rows, COLS), in_map),
            ],
            out_specs=pl.BlockSpec((None, 8, COLS), lambda s, i: (s, 0, 0)),
        ),
        compiler_params=pltpu.CompilerParams(
            dimension_semantics=("parallel", "arbitrary"),
            vmem_limit_bytes=VMEM_LIMIT_BYTES,
        ),
    )(x2d, y2d)


# ---------------------------------------------------------------- wrapper ---

def mse_loss(inputs, targets, reduction="mean"):
    # TODO(synk): torch permits (deprecated) broadcasting of mismatched shapes;
    # we require equal shapes like the intended usage.
    assert inputs.shape == targets.shape, "inputs/targets must match in shape"
    if reduction not in ("mean", "sum", "none"):
        raise ValueError(f"unknown reduction: {reduction}")

    orig_shape = inputs.shape
    n = inputs.size
    f32 = jnp.float32

    x = inputs.reshape(-1)
    y = targets.reshape(-1)

    rows = n // COLS
    n_bulk = rows * COLS
    tail = n - n_bulk

    # Tiny inputs (< 8 full 512-wide rows): plain JAX is optimal, skip the kernel.
    if rows < 8:
        sq = (x.astype(f32) - y.astype(f32)) ** 2
        if reduction == "none":
            return sq.reshape(orig_shape)
        s = jnp.sum(sq)
        return s if reduction == "sum" else s / f32(n)

    # Block-aligned bulk goes through the Pallas kernel (zero-copy 2D view when
    # n % 512 == 0); the < 512-element ragged tail is handled in plain JAX.
    if tail:
        xb, yb = x[:n_bulk], y[:n_bulk]
        xt = x[n_bulk:].astype(f32)
        yt = y[n_bulk:].astype(f32)
    else:
        xb, yb = x, y
    x2d = xb.reshape(rows, COLS)
    y2d = yb.reshape(rows, COLS)

    if reduction == "none":
        out2d = _sq_diff_2d(x2d, y2d, rows)
        if tail:
            # Only non-512-aligned sizes pay this single output concat copy.
            out = jnp.concatenate([out2d.reshape(-1), (xt - yt) ** 2])
            return out.reshape(orig_shape)
        return out2d.reshape(orig_shape)           # bitcast, no copy

    partials = _mse_partial_sums(x2d, y2d, rows)
    total = jnp.sum(partials)                      # tiny final reduce (<= 8K f32)
    if tail:
        total = total + jnp.sum((xt - yt) ** 2)
    if reduction == "sum":
        return total
    return total / f32(n)


if __name__ == "__main__":
    key = jax.random.PRNGKey(0)
    k1, k2, k3, k4 = jax.random.split(key, 4)

    # Small NCHW-like regression tensors (aligned fast path).
    x = jax.random.normal(k1, (2, 4, 64, 64), dtype=jnp.float32)
    t = jax.random.normal(k2, (2, 4, 64, 64), dtype=jnp.float32)

    out_mean = jax.block_until_ready(mse_loss(x, t, reduction="mean"))
    out_sum = jax.block_until_ready(mse_loss(x, t, reduction="sum"))
    out_none = jax.block_until_ready(mse_loss(x, t, reduction="none"))

    ref_none = (x - t) ** 2
    assert jnp.allclose(out_mean, jnp.mean(ref_none), rtol=1e-5, atol=1e-5)
    assert jnp.allclose(out_sum, jnp.sum(ref_none), rtol=1e-5, atol=1e-3)
    assert out_none.shape == x.shape and out_none.dtype == jnp.float32
    assert jnp.allclose(out_none, ref_none, rtol=1e-5, atol=1e-5)

    # Ragged bf16 case: exercises dtype-aware blocks, masked partial last
    # block, clamped ghost step, and the plain-JAX tail.
    xr = jax.random.normal(k3, (2, 3, 40, 40), dtype=jnp.bfloat16)
    tr = jax.random.normal(k4, (2, 3, 40, 40), dtype=jnp.bfloat16)
    ref_r = (xr.astype(jnp.float32) - tr.astype(jnp.float32)) ** 2

    got_mean = jax.block_until_ready(mse_loss(xr, tr, reduction="mean"))
    assert jnp.allclose(got_mean, jnp.mean(ref_r), rtol=1e-5, atol=1e-5)

    got_none = jax.block_until_ready(mse_loss(xr, tr, reduction="none"))
    assert got_none.shape == xr.shape and got_none.dtype == jnp.float32
    assert jnp.allclose(got_none, ref_r, rtol=1e-5, atol=1e-5)

    print("KERNEL_OK")
</pallas_src>

<mosaic_0001>
module attributes {stable_mosaic.version = 11 : i64} {
  func.func @kernel(%arg0: i32, %arg1: i32, %arg2: memref<16x512xf32, #tpu.memory_space<vmem>>, %arg3: memref<16x512xf32, #tpu.memory_space<vmem>>, %arg4: memref<1x8x512xf32, #tpu.memory_space<vmem>>) attributes {dimension_semantics = [#tpu.dimension_semantics<parallel>, #tpu.dimension_semantics<arbitrary>], iteration_bounds = array<i64: 2, 2>, scalar_prefetch = 0 : i64, scratch_operands = 0 : i64, tpu.core_type = #tpu.core_type<tc>, window_params = [{transform_indices = @transform_0, window_bounds = array<i64: 16, 512>}, {transform_indices = @transform_1, window_bounds = array<i64: 16, 512>}, {transform_indices = @transform_2, window_bounds = array<i64: 1, 8, 512>}]} {
    %c0_i32 = arith.constant 0 : i32
    %0 = arith.cmpi eq, %arg1, %c0_i32 : i32
    %1 = arith.extui %0 : i1 to i32
    %c0_i32_0 = arith.constant 0 : i32
    %2 = arith.cmpi ne, %1, %c0_i32_0 : i32
    scf.if %2 {
      %cst_10 = arith.constant 0.000000e+00 : f32
      %15 = vector.broadcast %cst_10 : f32 to vector<8x512xf32>
      %c0_11 = arith.constant 0 : index
      %c0_12 = arith.constant 0 : index
      %c0_13 = arith.constant 0 : index
      %16 = vector.load %arg4[%c0_11, %c0_12, %c0_13] : memref<1x8x512xf32, #tpu.memory_space<vmem>>, vector<1x8x512xf32>
      %17 = vector.shape_cast %16 : vector<1x8x512xf32> to vector<8x512xf32>
      %18 = vector.shape_cast %15 : vector<8x512xf32> to vector<1x8x512xf32>
      tpu.vector_store %arg4[%c0_11, %c0_12, %c0_13], %18 {strides = array<i32>} : memref<1x8x512xf32, #tpu.memory_space<vmem>>, vector<1x8x512xf32>,
    } else {
    }
    %c0 = arith.constant 0 : index
    %c0_1 = arith.constant 0 : index
    %3 = vector.load %arg2[%c0, %c0_1] : memref<16x512xf32, #tpu.memory_space<vmem>>, vector<16x512xf32>
    %c0_2 = arith.constant 0 : index
    %c0_3 = arith.constant 0 : index
    %4 = vector.load %arg3[%c0_2, %c0_3] : memref<16x512xf32, #tpu.memory_space<vmem>>, vector<16x512xf32>
    %5 = arith.subf %3, %4 : vector<16x512xf32>
    %6 = arith.mulf %5, %5 : vector<16x512xf32>
    %c0_4 = arith.constant 0 : index
    %c0_5 = arith.constant 0 : index
    %c0_6 = arith.constant 0 : index
    %7 = vector.load %arg4[%c0_4, %c0_5, %c0_6] : memref<1x8x512xf32, #tpu.memory_space<vmem>>, vector<1x8x512xf32>
    %8 = vector.shape_cast %7 : vector<1x8x512xf32> to vector<8x512xf32>
    %9 = vector.shape_cast %6 : vector<16x512xf32> to vector<2x8x512xf32>
    %cst = arith.constant dense<0.000000e+00> : vector<8x512xf32>
    %10 = vector.multi_reduction <add>, %9, %cst [0] : vector<2x8x512xf32> to vector<8x512xf32>
    %11 = arith.addf %8, %10 : vector<8x512xf32>
    %c0_7 = arith.constant 0 : index
    %c0_8 = arith.constant 0 : index
    %c0_9 = arith.constant 0 : index
    %12 = vector.load %arg4[%c0_7, %c0_8, %c0_9] : memref<1x8x512xf32, #tpu.memory_space<vmem>>, vector<1x8x512xf32>
    %13 = vector.shape_cast %12 : vector<1x8x512xf32> to vector<8x512xf32>
    %14 = vector.shape_cast %11 : vector<8x512xf32> to vector<1x8x512xf32>
    tpu.vector_store %arg4[%c0_7, %c0_8, %c0_9], %14 {strides = array<i32>} : memref<1x8x512xf32, #tpu.memory_space<vmem>>, vector<1x8x512xf32>,
    return
  }
  func.func @transform_0(%arg0: i32, %arg1: i32) -> (i32, i32) {
    %c2_i32 = arith.constant 2 : i32
    %0 = arith.muli %arg0, %c2_i32 : i32
    %1 = arith.addi %0, %arg1 : i32
    %c0_i32 = arith.constant 0 : i32
    %c0_i32_0 = arith.constant 0 : i32
    return %1, %c0_i32 : i32, i32
  }
  func.func @transform_1(%arg0: i32, %arg1: i32) -> (i32, i32) {
    %c2_i32 = arith.constant 2 : i32
    %0 = arith.muli %arg0, %c2_i32 : i32
    %1 = arith.addi %0, %arg1 : i32
    %c0_i32 = arith.constant 0 : i32
    %c0_i32_0 = arith.constant 0 : i32
    return %1, %c0_i32 : i32, i32
  }
  func.func @transform_2(%arg0: i32, %arg1: i32) -> (i32, i32, i32) {
    %c0_i32 = arith.constant 0 : i32
    %c0_i32_0 = arith.constant 0 : i32
    %c0_i32_1 = arith.constant 0 : i32
    return %arg0, %c0_i32, %c0_i32_0 : i32, i32, i32
  }
}

</mosaic_0001>

<llo_original>
// kernel: tpu_custom_call.1
$region0: #{tpu_custom_call.1}
  #allocation0 [shape = 'u32[]', space=smem, size = 0x4, offset = 0x4, fixed_abs, tag = 'smem constant byte address 0x4 - core index']
  #allocation1 [shape = 'u32[144,128]{1,0:T(1,128)}', space=vmem, size = 0x12000, scoped, tag = 'internal scratch']
  %s0 = inlined_call_operand.hbm [shape: f32[64,512], index: 0, kind: input, shape index: {}]
  %s1 = inlined_call_operand.hbm [shape: f32[64,512], index: 1, kind: input, shape index: {}]
  %s2 = inlined_call_operand.hbm [shape: f32[2,8,512], index: 2, kind: output, shape index: {}]
  %s3 = sld [smem:[#allocation0]]
  $region53: #{tpu_custom_call.1} parent=0
    _
  %s5 = ssub.s32 1, %s3
  %s6 = scalar_select 0, %s5, %s3
  $region1: #{tpu_custom_call.1} parent=0
    #allocation2 [shape = 'u8[65536]{0}', space=vmem, size = 0x10000, scoped, tag = 'input window, operand 0']
    #allocation3 [shape = 's32[2]{0}', space=sflag, size = 0x8, scoped, tag = 'scoped memory for tpu_custom_call.1']
    #allocation4 [shape = 's32[2]{0}', space=sflag, size = 0x8, scoped, tag = 'scoped memory for tpu_custom_call.1']
    #allocation5 [shape = 'u8[65536]{0}', space=vmem, size = 0x10000, scoped, tag = 'input window, operand 1']
    #allocation6 [shape = 's32[2]{0}', space=sflag, size = 0x8, scoped, tag = 'scoped memory for tpu_custom_call.1']
    #allocation7 [shape = 'u8[32768]{0}', space=vmem, size = 0x8000, scoped, tag = 'output window, operand 0']
    %7 = vsyncpa [#allocation3], 0
    %s8 = scalar_lea.sflag [#allocation3], 1
    %9 = vsyncpa %s8, 0
    %10 = vsyncpa [#allocation6], 0
    %s11 = scalar_lea.sflag [#allocation6], 1
    %12 = vsyncpa %s11, 0
    %13 = vsyncpa [#allocation4], 0
    %s14 = scalar_lea.sflag [#allocation4], 1
    %15 = vsyncpa %s14, 0
    loop: start=0, step=1, limit=6
    $region2: #{tpu_custom_call.1} parent=1 // loop_pre_header
      _
    $region3: #{tpu_custom_call.1} parent=1 // loop_header
      %s17 = sphi 0, %s21
      %p18 = scmp.ge.s32.totalorder %s17, 6
      %s24 = sphi 0, %s36
      %s25 = sphi 0, %s32
      %s26 = sphi 0, %s24
      %s27 = sphi 0, %s25
      %s28 = sphi 0, %s26
      %s29 = sphi 0, %s27
      %s43 = sphi 0, %s45
      %s46 = sphi 0, %s43
      %s47 = sphi 0, %s46
      %s63 = sphi 0, %s47
      %s73 = sphi 0, %s75
      %s76 = sphi 0, %s73
      %s77 = sphi 0, %s76
      %s93 = sphi 0, %s77
      %s99 = sphi 0, %s101
      %s102 = sphi 0, %s99
      %s103 = sphi 0, %s102
      %s119 = sphi 0, %s103
    $region4: #{tpu_custom_call.1} parent=1 // loop_header_branch
      %20 = sbr.rel (%p18) target = $region8
    $region5: #{tpu_custom_call.1} parent=1 // loop_body
      %s22 = ssub.s32 %s17, 1
      %s23 = ssub.s32 %s17, 2
      %s30 = sadd.s32 1, %s25
      %p31 = scmp.ge.s32.totalorder %s30, 2
      %s32 = scalar_select %p31, 0, %s30
      %s33 = sadd.s32 1, %s24
      %s34 = scalar_select %p31, %s33, %s24
      %p35 = scmp.ge.s32.totalorder %s34, 2
      %s36 = scalar_select %p35, 0, %s34
      %s37 = smul.u32 %s24, 2
      %s38 = sadd.s32 %s37, %s25
      %s39 = smul.u32 %s36, 2
      %s40 = sadd.s32 %s39, %s32
      %s41 = ssub.s32 %s38, %s40
      %p42 = scmp.eq.s32.totalorder %s41, 0
      %s44 = sadd.s32 %s43, 1
      %s45 = scalar_select %p42, %s43, %s44
      %p48 = pneg %p42
      %p49 = scmp.eq.s32.totalorder %s17, 3
      %p50 = por %p48, %p49
      %p51 = scmp.ne.s32.totalorder %s43, %s46
      %p52 = scmp.eq.s32.totalorder %s17, 0
      %p53 = por %p51, %p52
      %p54 = scmp.ne.s32.totalorder %s43, %s46
      %p55 = scmp.eq.s32.totalorder %s22, 3
      %p56 = por %p54, %p55
      %p57 = scmp.ne.s32.totalorder %s46, %s47
      %p58 = scmp.eq.s32.totalorder %s22, 0
      %p59 = por %p57, %p58
      %p60 = scmp.ne.s32.totalorder %s46, %s47
      %p61 = scmp.eq.s32.totalorder %s23, 3
      %p62 = por %p60, %p61
      %p64 = scmp.ne.s32.totalorder %s47, %s63
      %p65 = scmp.eq.s32.totalorder %s23, 0
      %p66 = por %p64, %p65
      %s67 = smul.u32 %s24, 2
      %s68 = sadd.s32 %s67, %s25
      %s69 = smul.u32 %s36, 2
      %s70 = sadd.s32 %s69, %s32
      %s71 = ssub.s32 %s68, %s70
      %p72 = scmp.eq.s32.totalorder %s71, 0
      %s74 = sadd.s32 %s73, 1
      %s75 = scalar_select %p72, %s73, %s74
      %p78 = pneg %p72
      %p79 = scmp.eq.s32.totalorder %s17, 3
      %p80 = por %p78, %p79
      %p81 = scmp.ne.s32.totalorder %s73, %s76
      %p82 = scmp.eq.s32.totalorder %s17, 0
      %p83 = por %p81, %p82
      %p84 = scmp.ne.s32.totalorder %s73, %s76
      %p85 = scmp.eq.s32.totalorder %s22, 3
      %p86 = por %p84, %p85
      %p87 = scmp.ne.s32.totalorder %s76, %s77
      %p88 = scmp.eq.s32.totalorder %s22, 0
      %p89 = por %p87, %p88
      %p90 = scmp.ne.s32.totalorder %s76, %s77
      %p91 = scmp.eq.s32.totalorder %s23, 3
      %p92 = por %p90, %p91
      %p94 = scmp.ne.s32.totalorder %s77, %s93
      %p95 = scmp.eq.s32.totalorder %s23, 0
      %p96 = por %p94, %p95
      %s97 = ssub.s32 %s24, %s36
      %p98 = scmp.eq.s32.totalorder %s97, 0
      %s100 = sadd.s32 %s99, 1
      %s101 = scalar_select %p98, %s99, %s100
      %p104 = pneg %p98
      %p105 = scmp.eq.s32.totalorder %s17, 3
      %p106 = por %p104, %p105
      %p107 = scmp.ne.s32.totalorder %s99, %s102
      %p108 = scmp.eq.s32.totalorder %s17, 0
      %p109 = por %p107, %p108
      %p110 = scmp.ne.s32.totalorder %s99, %s102
      %p111 = scmp.eq.s32.totalorder %s22, 3
      %p112 = por %p110, %p111
      %p113 = scmp.ne.s32.totalorder %s102, %s103
      %p114 = scmp.eq.s32.totalorder %s22, 0
      %p115 = por %p113, %p114
      %p116 = scmp.ne.s32.totalorder %s102, %s103
      %p117 = scmp.eq.s32.totalorder %s23, 3
      %p118 = por %p116, %p117
      %p120 = scmp.ne.s32.totalorder %s103, %s119
      %p121 = scmp.eq.s32.totalorder %s23, 0
      %p122 = por %p120, %p121
      %p123 = scmp.le.s32.totalorder 1, %s17
      %p124 = scmp.lt.s32.totalorder %s17, 5
      %p125 = pnand %p123, %p124
      %p126 = pneg %p125
      // Predicated region
      $region9: #{tpu_custom_call.1} parent=5 // pred_check
        _
      $region10: #{tpu_custom_call.1} parent=5 // pred_check_branch
        %128 = sbr.rel (%p125) target = $region12
      $region11: #{tpu_custom_call.1} parent=5 // pred_region
        %s129 = ssub.s32 %s17, 1
      $region12: #{tpu_custom_call.1} parent=5 // pred_fallthru
        _
      %p130 = scmp.lt.s32.totalorder %s17, 4
      // Predicated region
      $region13: #{tpu_custom_call.1} parent=5 // pred_check
        %p131 = pneg %p130
      $region14: #{tpu_custom_call.1} parent=5 // pred_check_branch
        %133 = sbr.rel (%p131) target = $region16
      $region15: #{tpu_custom_call.1} parent=5 // pred_region
        // Predicated region
        $region17: #{tpu_custom_call.1} parent=15 // pred_check
          %p134 = pneg %p53
        $region18: #{tpu_custom_call.1} parent=15 // pred_check_branch
          %136 = sbr.rel (%p134) target = $region20
        $region19: #{tpu_custom_call.1} parent=15 // pred_region
          %s137 = sand.u32 %s43, 1
          %s138 = scalar_lea.sflag [#allocation3], %s137
          %s139 = sand.u32 %s43, 1
          %s140 = smul.addr %s139, 64
          %s141 = scalar_lea.vmem [#allocation2], %s140
          %s142 = smul.u32 %s24, 2
          %s143 = sadd.s32 %s142, %s25
          %s144 = smul.u32 2, %s143
          %s146 = ssub.s32 1024, 1024
          %147 = vsyncadd %s138, %s146
          %s148 = smul.addr %s144, 4
          %s149 = smul.addr %s148, 128
          %s150 = scalar_lea.hbm %s0, %s149
          %s151 = sshll.u32 %s141, 4
          %s152 = int_to_ptr.vmem [resolvable:$true] %s151
          %157 = dma.hbm_to_vmem [thread:$0]  %s150, 1024, %s152, %s138, 512, 512, 32
        $region20: #{tpu_custom_call.1} parent=15 // pred_fallthru
          _
        // Predicated region
        $region21: #{tpu_custom_call.1} parent=15 // pred_check
          %p158 = pneg %p83
        $region22: #{tpu_custom_call.1} parent=15 // pred_check_branch
          %160 = sbr.rel (%p158) target = $region24
        $region23: #{tpu_custom_call.1} parent=15 // pred_region
          %s161 = sand.u32 %s73, 1
          %s162 = scalar_lea.sflag [#allocation6], %s161
          %s163 = sand.u32 %s73, 1
          %s164 = smul.addr %s163, 64
          %s165 = scalar_lea.vmem [#allocation5], %s164
          %s166 = smul.u32 %s24, 2
          %s167 = sadd.s32 %s166, %s25
          %s168 = smul.u32 2, %s167
          %s170 = ssub.s32 1024, 1024
          %171 = vsyncadd %s162, %s170
          %s172 = smul.addr %s168, 4
          %s173 = smul.addr %s172, 128
          %s174 = scalar_lea.hbm %s1, %s173
          %s175 = sshll.u32 %s165, 4
          %s176 = int_to_ptr.vmem [resolvable:$true] %s175
          %181 = dma.hbm_to_vmem [thread:$0]  %s174, 1024, %s176, %s162, 512, 512, 32
        $region24: #{tpu_custom_call.1} parent=15 // pred_fallthru
          _
      $region16: #{tpu_custom_call.1} parent=5 // pred_fallthru
        _
      %p182 = scmp.le.s32.totalorder 1, %s17
      %p183 = scmp.lt.s32.totalorder %s17, 5
      %p184 = pnand %p182, %p183
      %p185 = pneg %p184
      // Predicated region
      $region25: #{tpu_custom_call.1} parent=5 // pred_check
        _
      $region26: #{tpu_custom_call.1} parent=5 // pred_check_branch
        %187 = sbr.rel (%p184) target = $region28
      $region27: #{tpu_custom_call.1} parent=5 // pred_region
        %s188 = ssub.s32 %s17, 1
        %s189 = sand.u32 %s46, 1
        %s190 = scalar_lea.sflag [#allocation3], %s189
        %s191 = sand.u32 %s46, 1
        %s192 = smul.addr %s191, 64
        %s193 = scalar_lea.vmem [#allocation2], %s192
        // Predicated region
        $region29: #{tpu_custom_call.1} parent=27 // pred_check
          %p194 = pneg %p59
        $region30: #{tpu_custom_call.1} parent=27 // pred_check_branch
          %196 = sbr.rel (%p194) target = $region32
        $region31: #{tpu_custom_call.1} parent=27 // pred_region
          %197 = dma.done %s190, 1024
        $region32: #{tpu_custom_call.1} parent=27 // pred_fallthru
          _
        %s198 = sand.u32 %s76, 1
        %s199 = scalar_lea.sflag [#allocation6], %s198
        %s200 = sand.u32 %s76, 1
        %s201 = smul.addr %s200, 64
        %s202 = scalar_lea.vmem [#allocation5], %s201
        // Predicated region
        $region33: #{tpu_custom_call.1} parent=27 // pred_check
          %p203 = pneg %p89
        $region34: #{tpu_custom_call.1} parent=27 // pred_check_branch
          %205 = sbr.rel (%p203) target = $region36
        $region35: #{tpu_custom_call.1} parent=27 // pred_region
          %206 = dma.done %s199, 1024
        $region36: #{tpu_custom_call.1} parent=27 // pred_fallthru
          _
        %s207 = sand.u32 %s46, 1
        %s208 = scalar_lea.sflag [#allocation3], %s207
        %s209 = sand.u32 %s46, 1
        %s210 = smul.addr %s209, 64
        %s211 = scalar_lea.vmem [#allocation2], %s210
        %p212 = pneg %p59
        %p213 = pneg %p56
        %s214 = sand.u32 %s76, 1
        %s215 = scalar_lea.sflag [#allocation6], %s214
        %s216 = sand.u32 %s76, 1
        %s217 = smul.addr %s216, 64
        %s218 = scalar_lea.vmem [#allocation5], %s217
        %p219 = pneg %p89
        %p220 = pneg %p86
        %p221 = pneg %p115
        %p222 = pneg %p112
        %s223 = sand.u32 %s102, 1
        %s224 = scalar_lea.sflag [#allocation4], %s223
        %s225 = sand.u32 %s102, 1
        %s226 = smul.addr %s225, 32
        %s227 = scalar_lea.vmem [#allocation7], %s226
        %s228 = smul.u32 %s26, 2
        %s229 = sadd.s32 %s228, %s27
        %s230 = smul.u32 2, %s229
        %s231 = smul.u32 %s26, 2
        %s232 = sadd.s32 %s231, %s27
        %s233 = smul.u32 2, %s232
        %p234 = scmp.eq.s32.totalorder %s27, 0
        // Predicated region
        $region37: #{tpu_custom_call.1} parent=27 // pred_check
          %p235 = pneg %p234
        $region38: #{tpu_custom_call.1} parent=27 // pred_check_branch
          %237 = sbr.rel (%p235) target = $region40
        $region39: #{tpu_custom_call.1} parent=27 // pred_region
          %238 = vst [vmem:[%s227] sm:$0xff] 0.0
          %239 = vst [vmem:[%s227 + $0x8] sm:$0xff] 0.0
          %240 = vst [vmem:[%s227 + $0x10] sm:$0xff] 0.0
          %241 = vst [vmem:[%s227 + $0x18] sm:$0xff] 0.0
        $region40: #{tpu_custom_call.1} parent=27 // pred_fallthru
          _
        %v242 = vld [vmem:[%s193] sm:$0xff]
        %v243 = vld [vmem:[%s193 + $0x8] sm:$0xff]
        %v244 = vld [vmem:[%s193 + $0x10] sm:$0xff]
        %v245 = vld [vmem:[%s193 + $0x18] sm:$0xff]
        %v246 = vld [vmem:[%s193 + $0x20] sm:$0xff]
        %v247 = vld [vmem:[%s193 + $0x28] sm:$0xff]
        %v248 = vld [vmem:[%s193 + $0x30] sm:$0xff]
        %v249 = vld [vmem:[%s193 + $0x38] sm:$0xff]
        %v250 = vld [vmem:[%s202] sm:$0xff]
        %v251 = vld [vmem:[%s202 + $0x8] sm:$0xff]
        %v252 = vld [vmem:[%s202 + $0x10] sm:$0xff]
        %v253 = vld [vmem:[%s202 + $0x18] sm:$0xff]
        %v254 = vld [vmem:[%s202 + $0x20] sm:$0xff]
        %v255 = vld [vmem:[%s202 + $0x28] sm:$0xff]
        %v256 = vld [vmem:[%s202 + $0x30] sm:$0xff]
        %v257 = vld [vmem:[%s202 + $0x38] sm:$0xff]
        %v258 = vsub.f32 %v242, %v250
        %v259 = vsub.f32 %v243, %v251
        %v260 = vsub.f32 %v244, %v252
        %v261 = vsub.f32 %v245, %v253
        %v262 = vsub.f32 %v246, %v254
        %v263 = vsub.f32 %v247, %v255
        %v264 = vsub.f32 %v248, %v256
        %v265 = vsub.f32 %v249, %v257
        %v266 = vmul.f32 %v258, %v258
        %v267 = vmul.f32 %v259, %v259
        %v268 = vmul.f32 %v260, %v260
        %v269 = vmul.f32 %v261, %v261
        %v270 = vmul.f32 %v262, %v262
        %v271 = vmul.f32 %v263, %v263
        %v272 = vmul.f32 %v264, %v264
        %v273 = vmul.f32 %v265, %v265
        %v274 = vld [vmem:[%s227] sm:$0xff]
        %v275 = vld [vmem:[%s227 + $0x8] sm:$0xff]
        %v276 = vld [vmem:[%s227 + $0x10] sm:$0xff]
        %v277 = vld [vmem:[%s227 + $0x18] sm:$0xff]
        %v278 = vadd.f32 %v266, %v270
        %v279 = vadd.f32 %v267, %v271
        %v280 = vadd.f32 %v268, %v272
        %v281 = vadd.f32 %v269, %v273
        %v282 = vadd.f32 %v274, %v278
        %v283 = vadd.f32 %v275, %v279
        %v284 = vadd.f32 %v276, %v280
        %v285 = vadd.f32 %v277, %v281
        %286 = vst [vmem:[%s227] sm:$0xff] %v282
        %287 = vst [vmem:[%s227 + $0x8] sm:$0xff] %v283
        %288 = vst [vmem:[%s227 + $0x10] sm:$0xff] %v284
        %289 = vst [vmem:[%s227 + $0x18] sm:$0xff] %v285
        %s290 = sand.u32 %s102, 1
        %s291 = scalar_lea.sflag [#allocation4], %s290
        %s292 = sand.u32 %s102, 1
        %s293 = smul.addr %s292, 32
        %s294 = scalar_lea.vmem [#allocation7], %s293
        // Predicated region
        $region41: #{tpu_custom_call.1} parent=27 // pred_check
          %p295 = pneg %p112
        $region42: #{tpu_custom_call.1} parent=27 // pred_check_branch
          %297 = sbr.rel (%p295) target = $region44
        $region43: #{tpu_custom_call.1} parent=27 // pred_region
          %s299 = ssub.s32 512, 512
          %300 = vsyncadd %s291, %s299
          %s301 = smul.addr %s26, 4
          %s302 = smul.addr %s301, 128
          %s303 = scalar_lea.hbm %s2, %s302
          %s305 = sshll.u32 %s294, 4
          %s306 = int_to_ptr.vmem [resolvable:$true] %s305
          %308 = dma.vmem_to_hbm [thread:$0]  %s306, 512, %s303, %s291
        $region44: #{tpu_custom_call.1} parent=27 // pred_fallthru
          _
      $region28: #{tpu_custom_call.1} parent=5 // pred_fallthru
        _
      %p309 = scmp.le.s32.totalorder 2, %s17
      // Predicated region
      $region45: #{tpu_custom_call.1} parent=5 // pred_check
        %p310 = pneg %p309
      $region46: #{tpu_custom_call.1} parent=5 // pred_check_branch
        %312 = sbr.rel (%p310) target = $region48
      $region47: #{tpu_custom_call.1} parent=5 // pred_region
        %s313 = ssub.s32 %s17, 2
        // Predicated region
        $region49: #{tpu_custom_call.1} parent=47 // pred_check
          %p314 = pneg %p118
        $region50: #{tpu_custom_call.1} parent=47 // pred_check_branch
          %316 = sbr.rel (%p314) target = $region52
        $region51: #{tpu_custom_call.1} parent=47 // pred_region
          %s317 = sand.u32 %s103, 1
          %s318 = scalar_lea.sflag [#allocation4], %s317
          %s319 = sand.u32 %s103, 1
          %s320 = smul.addr %s319, 32
          %s321 = scalar_lea.vmem [#allocation7], %s320
          %322 = dma.done %s318, 512
        $region52: #{tpu_custom_call.1} parent=47 // pred_fallthru
          _
      $region48: #{tpu_custom_call.1} parent=5 // pred_fallthru
        _
    $region6: #{tpu_custom_call.1} parent=1 // loop_footer
      %s21 = sadd.s32 1, %s17
    $region7: #{tpu_custom_call.1} parent=1 // loop_footer_branch
      %16 = sbr.rel target = $region3
    $region8: #{tpu_custom_call.1} parent=1 // loop_exit
      _
    %323 = vsyncpa [#allocation3], 1
    %s324 = scalar_lea.sflag [#allocation3], 1
    %325 = vsyncpa %s324, 1
    %326 = vsyncpa [#allocation6], 1
    %s327 = scalar_lea.sflag [#allocation6], 1
    %328 = vsyncpa %s327, 1
    %329 = vsyncpa [#allocation4], 1
    %s330 = scalar_lea.sflag [#allocation4], 1
    %331 = vsyncpa %s330, 1

</llo_original>
